<compile_context>
chip_gen: v6e
topology: v6e:2x2x1
jax: 0.10.0
libtpu: 0.0.40
codegen_flags: <defaults>
</compile_context>

<pallas_src>
import numpy as np
import jax
import jax.numpy as jnp
from jax import lax
from jax.experimental import pallas as pl
from jax.experimental.pallas import tpu as pltpu

_EPS = 1e-3  # ImgChLayerNorm eps


# --------------------------------------------------------------------------
# Deconv tap algebra:  output row 2*I+ph gets input row I+dih via kernel tap
# kh = ph + 1 - 2*dih (when 0 <= kh <= 3); identically for columns.
# --------------------------------------------------------------------------
def _tap_k(parity, delta):
    k = parity + 1 - 2 * delta
    return k if 0 <= k <= 3 else None


# --------------------------------------------------------------------------
# VMEM / tiling helpers (generation aware)
# --------------------------------------------------------------------------
def _vmem_limits():
    """(vmem_limit_bytes, per-call block budget).  64 MiB on v7x, 128 MiB on
    v5e/v6e; fall back to the conservative 64 MiB if the query fails."""
    cap = 64 << 20
    try:
        info = pltpu.get_tpu_info()
        cap = int(getattr(info, "vmem_capacity_bytes", cap) or cap)
    except Exception:
        pass
    limit = max(32 << 20, min(cap - (8 << 20), 112 << 20))
    return limit, limit // 2


def _tile(n, cap, align):
    """Largest tile <= cap that divides n and is `align`-aligned; else n (one block)."""
    if n <= cap:
        return n
    start = cap - (cap % align)
    for t in range(start, 0, -align):
        if n % t == 0:
            return t
    return n


def _deconv_batch_tile(batch, ih, iw, ic, oc, budget_bytes, target_rows=1024):
    """Images per grid step: aim at ~1024 matmul rows, but (a) stay inside the
    per-generation VMEM budget and (b) keep >= 2 grid steps when batch >= 2 so
    the "parallel" batch axis feeds both v7x TensorCores / megacore."""
    pix = ih * iw
    cpad = lambda c: max(128, -(-c // 128) * 128)          # lane padding
    per_img = (2 * pix * cpad(ic) * 2                      # double-buffered bf16 input block
               + 2 * pix * cpad(4 * oc) * 4                # double-buffered output block
               + 4 * pix * cpad(3 * ic) * 2                # in-kernel im2col temporaries (bf16)
               + 2 * pix * cpad(4 * oc) * 4)               # f32 accumulator + epilogue temps
    bb = max(1, min(target_rows // max(pix, 1), budget_bytes // max(per_img, 1)))
    if batch >= 2:
        bb = min(bb, batch // 2)
    bb = max(1, min(bb, batch))
    while batch % bb:
        bb -= 1
    return bb


# --------------------------------------------------------------------------
# Pallas kernels
# --------------------------------------------------------------------------
def _linear_kernel(x_ref, w_ref, b_ref, o_ref):
    acc = jnp.dot(x_ref[...], w_ref[...], preferred_element_type=jnp.float32)
    o_ref[...] = (acc + b_ref[...]).astype(o_ref.dtype)


def _deconv_core(x_ref, slab_ref):
    """Shared deconv core.

    x_ref:    (Bb, IH, IW, IC)   bf16 — raw (unpadded) activation block.
    slab_ref: (3, 3*IC, 4*OC)    bf16 — merged-parity weight slabs per row band.
    Returns (acc, (Bb, IH, IW)): acc is (Bb*IH*IW, 4*OC) f32 whose lane layout
    is [row-parity, col-parity, OC].
    """
    Bb, IH, IW, IC = x_ref.shape
    M = Bb * IH * IW
    x = x_ref[...]
    # Column im2col in VMEM: groups are input columns (iw-1, iw, iw+1), zeroed
    # at the edges.  No HBM pad/concat pass.
    zc = jnp.zeros((Bb, IH, 1, IC), x.dtype)
    xm = jnp.concatenate([zc, x[:, :, :IW - 1, :]], axis=2)      # col iw-1
    xq = jnp.concatenate([x[:, :, 1:, :], zc], axis=2)           # col iw+1
    xcol = jnp.concatenate([xm, x, xq], axis=-1)                 # (Bb, IH, IW, 3*IC)
    # Row padding so the three row bands are plain leading-axis slices.
    zr = jnp.zeros((Bb, 1, IW, 3 * IC), x.dtype)
    xcolp = jnp.concatenate([zr, xcol, zr], axis=1)              # (Bb, IH+2, IW, 3*IC)
    acc = None
    for d in range(3):                                           # dih = d - 1
        band = xcolp[:, d:d + IH, :, :].reshape(M, 3 * IC)
        y = jnp.dot(band, slab_ref[d], preferred_element_type=jnp.float32)
        acc = y if acc is None else acc + y
    return acc, (Bb, IH, IW)


def _ln_elu_pair(y, gamma2, beta2, oc):
    """LayerNorm over `oc` channels per output pixel + ELU, applied to a
    (M, 2*oc) tile packing the two column parities along lanes.  Masked lane
    reductions keep everything full-width (no lane slices / relayouts)."""
    oc2 = y.shape[-1]
    lane = lax.broadcasted_iota(jnp.int32, (1, oc2), 1)
    left = lane < oc
    inv = 1.0 / oc
    s_all = jnp.sum(y, axis=-1, keepdims=True)
    s_l = jnp.sum(jnp.where(left, y, 0.0), axis=-1, keepdims=True)
    mu = jnp.where(left, s_l, s_all - s_l) * inv
    d = y - mu
    d2 = d * d
    q_all = jnp.sum(d2, axis=-1, keepdims=True)
    q_l = jnp.sum(jnp.where(left, d2, 0.0), axis=-1, keepdims=True)
    var = jnp.where(left, q_l, q_all - q_l) * inv
    z = d * lax.rsqrt(var + _EPS) * gamma2 + beta2
    return jnp.where(z > 0, z, jnp.expm1(jnp.minimum(z, 0.0)))   # ELU(alpha=1)


def _fold_half(zh, Bb, IH, IW):
    """(Bb*IH*IW, 2*OC) -> (Bb, IH, IW*2*OC): fold width into the lane axis so
    the store is lane-dense (single in-kernel relayout, no HBM cost)."""
    oc2 = zh.shape[-1]
    return zh.reshape(Bb, IH, IW * oc2)


def _deconv_ln_elu_kernel(x_ref, slab_ref, g2_ref, b2_ref, o_ref):
    acc, (Bb, IH, IW) = _deconv_core(x_ref, slab_ref)
    oc2 = acc.shape[-1] // 2
    g2 = g2_ref[...]
    b2 = b2_ref[...]
    halves = []
    for ph in range(2):                                          # row parity
        zh = _ln_elu_pair(acc[:, ph * oc2:(ph + 1) * oc2], g2, b2, oc2 // 2)
        halves.append(_fold_half(zh, Bb, IH, IW))
    o_ref[...] = jnp.concatenate(halves, axis=-1).astype(o_ref.dtype)


def _deconv_bias_kernel(x_ref, slab_ref, b2_ref, o_ref):
    acc, (Bb, IH, IW) = _deconv_core(x_ref, slab_ref)
    oc2 = acc.shape[-1] // 2
    b2 = b2_ref[...]
    halves = []
    for ph in range(2):
        zh = acc[:, ph * oc2:(ph + 1) * oc2] + b2
        halves.append(_fold_half(zh, Bb, IH, IW))
    o_ref[...] = jnp.concatenate(halves, axis=-1).astype(o_ref.dtype)


# --------------------------------------------------------------------------
# Host-side weight packing
# --------------------------------------------------------------------------
def _build_deconv_slabs(w, dtype=jnp.bfloat16):
    """w: (4, 4, IC, OC) -> (3, 3*IC, 4*OC) merged-parity slabs.

    slabs[d] is the RHS for the row band at input offset dih = d-1.  K rows are
    grouped by column offset djw = c-1; N columns are [row-parity, col-parity,
    OC].  (parity, offset) combinations with no kernel tap are zero columns."""
    _, _, ic, oc = w.shape
    zeros = jnp.zeros((ic, oc), w.dtype)
    slabs = []
    for d in range(3):
        rows = []
        for c in range(3):
            cols = []
            for ph in range(2):
                kh = _tap_k(ph, d - 1)
                for pw in range(2):
                    kw = _tap_k(pw, c - 1)
                    cols.append(w[kh, kw] if (kh is not None and kw is not None) else zeros)
            rows.append(jnp.concatenate(cols, axis=-1))          # (IC, 4*OC)
        slabs.append(jnp.concatenate(rows, axis=0))              # (3*IC, 4*OC)
    return jnp.stack(slabs, 0).astype(dtype)                     # (3, 3*IC, 4*OC)


# --------------------------------------------------------------------------
# pallas_call wrappers
# --------------------------------------------------------------------------
def _linear(x, w_bf, b, vmem_limit):
    B, F = x.shape
    E = w_bf.shape[1]
    tm = _tile(B, 1024, 8)
    te = _tile(E, 2048, 128)
    return pl.pallas_call(
        _linear_kernel,
        out_shape=jax.ShapeDtypeStruct((B, E), jnp.bfloat16),
        grid_spec=pltpu.PrefetchScalarGridSpec(
            num_scalar_prefetch=0,
            grid=(B // tm, E // te),
            in_specs=[pl.BlockSpec((tm, F), lambda r, e: (r, 0)),
                      pl.BlockSpec((F, te), lambda r, e: (0, e)),
                      pl.BlockSpec((1, te), lambda r, e: (0, e))],
            out_specs=pl.BlockSpec((tm, te), lambda r, e: (r, e)),
        ),
        compiler_params=pltpu.CompilerParams(
            dimension_semantics=("parallel", "parallel"),
            vmem_limit_bytes=vmem_limit),
    )(x.astype(jnp.bfloat16), w_bf, b)


def _deconv_block(x, layer, vmem_limit, block_budget):
    """One ConvTranspose2d(k=4, s=2, pad=1) layer with fused LN+ELU or bias."""
    B, IH, IW, IC = x.shape
    slab = layer["slab"]                          # (3, 3*IC, 4*OC) bf16
    oc4 = slab.shape[-1]
    OC = oc4 // 4
    assert layer["norm"] == layer["act"], "fused epilogue assumes norm <=> ELU"
    Bb = _deconv_batch_tile(B, IH, IW, IC, OC, block_budget)
    x = x.astype(jnp.bfloat16)
    if layer["norm"]:
        kernel_fn = _deconv_ln_elu_kernel
        extras = (layer["gamma2"], layer["beta2"])
        out_dtype = jnp.bfloat16                  # feeds the next layer's bf16 matmul
    else:
        kernel_fn = _deconv_bias_kernel
        extras = (layer["bias2"],)
        out_dtype = jnp.float32
    minor = 2 * IW * 2 * OC                       # [row-parity, IW, col-parity, OC] lanes
    # TODO(synk): the invariant slab / gamma / beta / bias blocks could be
    # single-buffered (pipeline_mode=pl.Buffered(1)) to reclaim a little VMEM.
    out = pl.pallas_call(
        kernel_fn,
        out_shape=jax.ShapeDtypeStruct((B, IH, minor), out_dtype),
        grid_spec=pltpu.PrefetchScalarGridSpec(
            num_scalar_prefetch=0,
            grid=(B // Bb,),
            in_specs=[pl.BlockSpec((Bb, IH, IW, IC), lambda b: (b, 0, 0, 0)),
                      pl.BlockSpec((3, 3 * IC, oc4), lambda b: (0, 0, 0))]
                     + [pl.BlockSpec((1, 2 * OC), lambda b: (0, 0)) for _ in extras],
            out_specs=pl.BlockSpec((Bb, IH, minor), lambda b: (b, 0, 0)),
        ),
        compiler_params=pltpu.CompilerParams(
            dimension_semantics=("parallel",),
            vmem_limit_bytes=vmem_limit),
    )(x, slab, *extras)
    # Row-major (B, IH, ph, IW, pw, OC) == (B, 2*IH, 2*IW, OC): metadata-only reshape.
    return out.reshape(B, 2 * IH, 2 * IW, OC)


# --------------------------------------------------------------------------
# Parameter init (deterministic, mirrors ConvDecoder.__init__ shape logic)
# --------------------------------------------------------------------------
def init_conv_decoder(key, feat_size, shape=(3, 16, 16), depth=8, minres=4):
    layer_num = int(np.log2(shape[1]) - np.log2(minres))
    out_ch = minres ** 2 * depth * 2 ** (layer_num - 1)
    keys = jax.random.split(key, 2 + 2 * layer_num)
    lin_w = jax.random.uniform(keys[0], (feat_size, out_ch), jnp.float32, -0.06, 0.06)
    params = {
        # torch Linear weight is (out, in); we store its transpose (in, out).
        "lin_w": lin_w,
        "lin_wb": lin_w.astype(jnp.bfloat16),
        "lin_b": jax.random.uniform(keys[1], (1, out_ch), jnp.float32, -0.06, 0.06),
        "layers": [],
    }
    in_dim = out_ch // minres ** 2
    out_dim = in_dim // 2
    for i in range(layer_num):
        norm, act, bias = True, True, False
        if i == layer_num - 1:
            out_dim, act, bias, norm = shape[0], False, True, False
        if i:
            in_dim = 2 ** (layer_num - (i - 1) - 2) * depth
        # torch ConvTranspose2d weight is (in, out, kh, kw); we store (kh, kw, in, out).
        w = 0.05 * jax.random.normal(keys[2 + 2 * i], (4, 4, in_dim, out_dim), jnp.float32)
        layer = {"w": w, "norm": norm, "act": act,
                 "slab": _build_deconv_slabs(w)}               # pre-packed bf16 MXU slabs
        if norm:
            g = jnp.ones((1, out_dim), jnp.float32)
            b = jnp.zeros((1, out_dim), jnp.float32)
            layer.update(gamma=g, beta=b,
                         gamma2=jnp.concatenate([g, g], axis=-1),
                         beta2=jnp.concatenate([b, b], axis=-1))
        if bias:
            bb = 0.05 * jax.random.normal(keys[3 + 2 * i], (1, out_dim), jnp.float32)
            layer.update(bias=bb, bias2=jnp.concatenate([bb, bb], axis=-1))
        params["layers"].append(layer)
        in_dim = out_dim
        out_dim //= 2
    return params


# --------------------------------------------------------------------------
# Forward pass (semantics of ConvDecoder.forward)
# --------------------------------------------------------------------------
def conv_decoder_forward(features, params, shape=(3, 16, 16), minres=4, cnn_sigmoid=False):
    lead = features.shape[:-1]
    vmem_limit, block_budget = _vmem_limits()
    feat2d = features.reshape(-1, features.shape[-1])
    x = _linear(feat2d, params["lin_wb"], params["lin_b"], vmem_limit)
    B, embed = x.shape
    # == torch: reshape(-1, minres, minres, embed//minres**2).permute(0,3,1,2), kept NHWC here
    x = x.reshape(B, minres, minres, embed // minres ** 2)
    # TODO(synk): the first 4x4->8x8->16x16 layers could be fused into one
    # pallas_call keeping the intermediate in VMEM scratch; kept separate here.
    for layer in params["layers"]:
        x = _deconv_block(x, layer, vmem_limit, block_budget)
    # == torch: reshape to features.shape[:-1]+shape then permute channels last
    mean = x.reshape(lead + (shape[1], shape[2], shape[0]))
    if cnn_sigmoid:
        mean = jax.nn.sigmoid(mean) - 0.5
    return mean


# --------------------------------------------------------------------------
# Pure-JAX f32 reference for validation
# --------------------------------------------------------------------------
def _reference_forward(features, params, shape=(3, 16, 16), minres=4):
    feat2d = features.reshape(-1, features.shape[-1])
    x = feat2d @ params["lin_w"] + params["lin_b"]
    B, embed = x.shape
    x = x.reshape(B, minres, minres, embed // minres ** 2)
    for layer in params["layers"]:
        wf = layer["w"][::-1, ::-1, :, :]
        x = lax.conv_general_dilated(
            x, wf, window_strides=(1, 1), padding=((2, 2), (2, 2)),
            lhs_dilation=(2, 2), dimension_numbers=("NHWC", "HWIO", "NHWC"))
        if layer["norm"]:
            mu = jnp.mean(x, -1, keepdims=True)
            var = jnp.mean(jnp.square(x - mu), -1, keepdims=True)
            x = (x - mu) * lax.rsqrt(var + _EPS) * layer["gamma"][0] + layer["beta"][0]
            x = jnp.where(x > 0, x, jnp.expm1(jnp.minimum(x, 0.0)))
        else:
            x = x + layer["bias"][0]
    return x.reshape(features.shape[:-1] + (shape[1], shape[2], shape[0]))


if __name__ == "__main__":
    key = jax.random.PRNGKey(0)
    k_feat, k_params = jax.random.split(key)

    feat_size = 32
    shape = (3, 16, 16)   # small (C, H, W); module default is (3, 64, 64)
    depth = 8
    minres = 4
    batch = 2

    params = init_conv_decoder(k_params, feat_size, shape=shape, depth=depth, minres=minres)
    features = jax.random.normal(k_feat, (batch, feat_size), jnp.float32)

    out = conv_decoder_forward(features, params, shape=shape, minres=minres)
    out = jax.block_until_ready(out)
    assert out.shape == (batch, shape[1], shape[2], shape[0]), out.shape

    ref = _reference_forward(features, params, shape=shape, minres=minres)
    # Tolerance accounts for bf16 MXU inputs / bf16 inter-layer activations vs f32 reference.
    np.testing.assert_allclose(np.asarray(out, np.float32), np.asarray(ref),
                               rtol=3e-2, atol=3e-2)

    print("KERNEL_OK")
</pallas_src>

<mosaic_0001>
module attributes {stable_mosaic.version = 11 : i64} {
  func.func @_linear_kernel(%arg0: i32, %arg1: i32, %arg2: memref<2x32xbf16, #tpu.memory_space<vmem>>, %arg3: memref<32x256xbf16, #tpu.memory_space<vmem>>, %arg4: memref<1x256xf32, #tpu.memory_space<vmem>>, %arg5: memref<2x256xbf16, #tpu.memory_space<vmem>>) attributes {dimension_semantics = [#tpu.dimension_semantics<parallel>, #tpu.dimension_semantics<parallel>], iteration_bounds = array<i64: 1, 1>, scalar_prefetch = 0 : i64, scratch_operands = 0 : i64, tpu.core_type = #tpu.core_type<tc>, window_params = [{transform_indices = @transform_0, window_bounds = array<i64: 2, 32>}, {transform_indices = @transform_1, window_bounds = array<i64: 32, 256>}, {transform_indices = @transform_2, window_bounds = array<i64: 1, 256>}, {transform_indices = @transform_3, window_bounds = array<i64: 2, 256>}]} {
    %c0 = arith.constant 0 : index
    %c0_0 = arith.constant 0 : index
    %0 = vector.load %arg2[%c0, %c0_0] : memref<2x32xbf16, #tpu.memory_space<vmem>>, vector<2x32xbf16>
    %c0_1 = arith.constant 0 : index
    %c0_2 = arith.constant 0 : index
    %1 = vector.load %arg3[%c0_1, %c0_2] : memref<32x256xbf16, #tpu.memory_space<vmem>>, vector<32x256xbf16>
    %cst = arith.constant dense<0.000000e+00> : vector<2x256xf32>
    %2 = tpu.matmul %0, %1, %cst {dimension_numbers = #tpu.dot_dimension_numbers<[1], [0], [0], [1], [0, 0, 1, 1], [], []>} : vector<2x32xbf16>, vector<32x256xbf16>, vector<2x256xf32> -> vector<2x256xf32>
    %c0_3 = arith.constant 0 : index
    %c0_4 = arith.constant 0 : index
    %3 = vector.load %arg4[%c0_3, %c0_4] : memref<1x256xf32, #tpu.memory_space<vmem>>, vector<1x256xf32>
    %4 = vector.broadcast %3 : vector<1x256xf32> to vector<2x256xf32>
    %5 = arith.addf %2, %4 : vector<2x256xf32>
    %6 = arith.truncf %5 : vector<2x256xf32> to vector<2x256xbf16>
    %c0_5 = arith.constant 0 : index
    %c0_6 = arith.constant 0 : index
    %7 = vector.load %arg5[%c0_5, %c0_6] : memref<2x256xbf16, #tpu.memory_space<vmem>>, vector<2x256xbf16>
    tpu.vector_store %arg5[%c0_5, %c0_6], %6 {strides = array<i32>} : memref<2x256xbf16, #tpu.memory_space<vmem>>, vector<2x256xbf16>,
    return
  }
  func.func @transform_0(%arg0: i32, %arg1: i32) -> (i32, i32) {
    %c0_i32 = arith.constant 0 : i32
    %c0_i32_0 = arith.constant 0 : i32
    return %arg0, %c0_i32 : i32, i32
  }
  func.func @transform_1(%arg0: i32, %arg1: i32) -> (i32, i32) {
    %c0_i32 = arith.constant 0 : i32
    %c0_i32_0 = arith.constant 0 : i32
    return %c0_i32, %arg1 : i32, i32
  }
  func.func @transform_2(%arg0: i32, %arg1: i32) -> (i32, i32) {
    %c0_i32 = arith.constant 0 : i32
    %c0_i32_0 = arith.constant 0 : i32
    return %c0_i32, %arg1 : i32, i32
  }
  func.func @transform_3(%arg0: i32, %arg1: i32) -> (i32, i32) {
    %c0_i32 = arith.constant 0 : i32
    return %arg0, %arg1 : i32, i32
  }
}

</mosaic_0001>

<llo_original>
// kernel: tpu_custom_call.1
$region0: #{tpu_custom_call.1}
  #allocation0 [shape = 'u32[]', space=smem, size = 0x4, offset = 0x4, fixed_abs, tag = 'smem constant byte address 0x4 - core index']
  #allocation1 [shape = 'u32[144,128]{1,0:T(1,128)}', space=vmem, size = 0x12000, scoped, tag = 'internal scratch']
  %s0 = inlined_call_operand.hbm [shape: bf16[2,32], index: 0, kind: input, shape index: {}]
  %s1 = inlined_call_operand.hbm [shape: bf16[32,256], index: 1, kind: input, shape index: {}]
  %s2 = inlined_call_operand.vmem [shape: f32[1,256], index: 2, kind: input, shape index: {}]
  %s3 = inlined_call_operand.hbm [shape: bf16[2,256], index: 3, kind: output, shape index: {}]
  %s4 = sld [smem:[#allocation0]]
  $region30: #{tpu_custom_call.1} parent=0
    _
  %s6 = ssub.s32 1, %s4
  %s7 = scalar_select 0, %s6, %s4
  $region1: #{tpu_custom_call.1} parent=0
    #allocation2 [shape = 'u8[512]{0}', space=vmem, size = 0x400, scoped, tag = 'input window, operand 0, single buffered']
    #allocation3 [shape = 's32[1]{0}', space=sflag, size = 0x4, scoped, tag = 'scoped memory for tpu_custom_call.1']
    #allocation4 [shape = 's32[1]{0}', space=sflag, size = 0x4, scoped, tag = 'scoped memory for tpu_custom_call.1']
    #allocation5 [shape = 'u8[16384]{0}', space=vmem, size = 0x4000, scoped, tag = 'input window, operand 1, single buffered']
    #allocation6 [shape = 's32[1]{0}', space=sflag, size = 0x4, scoped, tag = 'scoped memory for tpu_custom_call.1']
    #allocation7 [shape = 'u8[1024]{0}', space=vmem, size = 0x400, scoped, tag = 'output window, operand 0, single buffered']
    %8 = vsyncpa [#allocation3], 0
    %9 = vsyncpa [#allocation6], 0
    %10 = vsyncpa [#allocation4], 0
    // Predicated region
    $region2: #{tpu_custom_call.1} parent=1 // pred_check
      _
    $region3: #{tpu_custom_call.1} parent=1 // pred_check_branch
      %12 = sbr.rel (0) target = $region5
    $region4: #{tpu_custom_call.1} parent=1 // pred_region
      %s14 = ssub.s32 16, 16
      %15 = vsyncadd [#allocation3], %s14
      %s17 = sshll.u32 [#allocation2], 4
      %s18 = int_to_ptr.vmem [resolvable:$true] %s17
      %20 = dma.hbm_to_vmem [thread:$0]  %s0, 16, %s18, [#allocation3]
    $region5: #{tpu_custom_call.1} parent=1 // pred_fallthru
      _
    // Predicated region
    $region6: #{tpu_custom_call.1} parent=1 // pred_check
      _
    $region7: #{tpu_custom_call.1} parent=1 // pred_check_branch
      %22 = sbr.rel (0) target = $region9
    $region8: #{tpu_custom_call.1} parent=1 // pred_region
      %s24 = ssub.s32 512, 512
      %25 = vsyncadd [#allocation6], %s24
      %s26 = sshll.u32 [#allocation5], 4
      %s27 = int_to_ptr.vmem [resolvable:$true] %s26
      %32 = dma.hbm_to_vmem [thread:$0]  %s1, 512, %s27, [#allocation6], 128, 128, 8
    $region9: #{tpu_custom_call.1} parent=1 // pred_fallthru
      _
    // Predicated region
    $region10: #{tpu_custom_call.1} parent=1 // pred_check
      _
    $region11: #{tpu_custom_call.1} parent=1 // pred_check_branch
      %34 = sbr.rel (0) target = $region13
    $region12: #{tpu_custom_call.1} parent=1 // pred_region
      _
    $region13: #{tpu_custom_call.1} parent=1 // pred_fallthru
      _
    // Predicated region
    $region14: #{tpu_custom_call.1} parent=1 // pred_check
      _
    $region15: #{tpu_custom_call.1} parent=1 // pred_check_branch
      %36 = sbr.rel (0) target = $region17
    $region16: #{tpu_custom_call.1} parent=1 // pred_region
      %37 = dma.done [#allocation3], 16
    $region17: #{tpu_custom_call.1} parent=1 // pred_fallthru
      _
    // Predicated region
    $region18: #{tpu_custom_call.1} parent=1 // pred_check
      _
    $region19: #{tpu_custom_call.1} parent=1 // pred_check_branch
      %39 = sbr.rel (0) target = $region21
    $region20: #{tpu_custom_call.1} parent=1 // pred_region
      %40 = dma.done [#allocation6], 512
    $region21: #{tpu_custom_call.1} parent=1 // pred_fallthru
      _
    %v42 = vld [vmem:[#allocation2] sm:$0x1]
    %v43 = vld [vmem:[#allocation5] sm:$0xff]
    %v44 = vld [vmem:[#allocation5 + $0x8] sm:$0xff]
    %v45 = vld [vmem:[#allocation5 + $0x10] sm:$0xff]
    %v46 = vld [vmem:[#allocation5 + $0x18] sm:$0xff]
    %v47 = vld [vmem:[%s2] sm:$0x3]
    %v49 = vlaneseq
    %v50 = vshrl.u32 %v49, 7
    %v51 = vsub.s32 0, %v50
    %v52 = vrot.slane %v47, %v51
    %v53 = vlaneseq
    %v54 = vshrl.u32 %v53, 7
    %v55 = vsub.s32 1, %v54
    %v56 = vrot.slane %v47, %v55
    %v63 = vunpack.c.l.b16 %v43
    %v64 = vunpack.c.h.b16 %v43
    %v65 = vunpack.c.l.b16 %v44
    %v66 = vunpack.c.h.b16 %v44
    %v67 = vunpack.c.l.b16 %v45
    %v68 = vunpack.c.h.b16 %v45
    %v69 = vunpack.c.l.b16 %v46
    %v70 = vunpack.c.h.b16 %v46
    %v71 = vpack.c.b16 %v65, %v63
    %v72 = vpack.c.b16 %v66, %v64
    %v73 = vpack.c.b16 %v69, %v67
    %v74 = vpack.c.b16 %v70, %v68
    %vm79 = vcmask 261120
    %v81 = vsel %vm79, %v42, 0
    %83 = vmatprep.subr.bf16.mxu0 0
    %84 = vmatpush1.bf16.msra.mxu0 0
    %85 = vmatprep.subr.bf16.mxu0 0
    %86 = vmatpush1.bf16.msra.mxu0 0
    %87 = vmatprep.subr.bf16.mxu0 0
    %88 = vmatpush1.bf16.msra.mxu0 0
    %89 = vmatprep.subr.bf16.mxu0 0
    %90 = vmatpush1.bf16.msra.mxu0 0
    %91 = vmatprep.subr.bf16.mxu0 0
    %92 = vmatpush1.bf16.msra.mxu0 0
    %93 = vmatprep.subr.bf16.mxu0 0
    %94 = vmatpush1.bf16.msra.mxu0 0
    %95 = vmatprep.subr.bf16.mxu0 %v74
    %96 = vmatpush1.bf16.msra.mxu0 %v73
    %97 = vmatprep.subr.bf16.mxu0 %v72
    %98 = vmatpush1.bf16.msra.mxu0 %v71
    %99 = vmatprep.subr.bf16.mxu0 0
    %100 = vmatpush2.bf16.msra.mxu0 0
    %101 = vmatprep.subr.bf16.mxu0 0
    %102 = vmatpush2.bf16.msra.mxu0 0
    %103 = vmatprep.subr.bf16.mxu0 0
    %104 = vmatpush2.bf16.msra.mxu0 0
    %105 = vmatprep.subr.bf16.mxu0 0
    %106 = vmatpush2.bf16.msra.mxu0 0
    %107 = vmatprep.subr.bf16.mxu0 0
    %108 = vmatpush2.bf16.msra.mxu0 0
    %109 = vmatprep.subr.bf16.mxu0 0
    %110 = vmatpush2.bf16.msra.mxu0 0
    %111 = vmatprep.subr.bf16.mxu0 0
    %112 = vmatpush2.bf16.msra.mxu0 0
    %113 = vmatprep.subr.bf16.mxu0 0
    %114 = vmatpush2.bf16.msra.mxu0 0
    %115 = vmatprep.mubr.bf16.mxu0 0
    %116 = vmatmul.mubr.bf16.gmra.mxu0 %v81
    %v117 = vpop.f32.mrf.mxu0
    %v118 = vadd.f32 %v52, %v117
    %v119 = vpop.f32.mrf.mxu0
    %v120 = vadd.f32 %v56, %v119
    %v121 = vpop.f32.mrf.mxu0
    %v122 = vpop.f32.mrf.mxu0
    %123 = vdwg.mxu0
    %v124 = vpack.c.bf16 %v118, %v118
    %v125 = vpack.c.bf16 %v120, %v120
    %v128 = vcombine.low %v124, %v125
    %v130 = vunpack.c.l.s4 1966171168
    %v131 = vunpack.c.0.s8 %v130
    %v132 = vlaneseq
    %v133 = vshrl.u32 %v132, 7
    %v134 = vsub.s32 %v131, %v133
    %v135 = vrot.slane %v128, %v134
    %v137 = vunpack.c.l.s4 1966171168
    %v138 = vunpack.c.0.s8 %v137
    %v139 = vlaneseq
    %v140 = vshrl.u32 %v139, 7
    %v141 = vsub.s32 %v138, %v140
    %v142 = vrot.slane %v135, %v141
    %144 = vst [vmem:[#allocation7] sm:$0x3] %v142
    // Predicated region
    $region22: #{tpu_custom_call.1} parent=1 // pred_check
      _
    $region23: #{tpu_custom_call.1} parent=1 // pred_check_branch
      %146 = sbr.rel (0) target = $region25
    $region24: #{tpu_custom_call.1} parent=1 // pred_region
      %s148 = ssub.s32 32, 32
      %149 = vsyncadd [#allocation4], %s148
      %s151 = sshll.u32 [#allocation7], 4
      %s152 = int_to_ptr.vmem [resolvable:$true] %s151
      %154 = dma.vmem_to_hbm [thread:$0]  %s152, 32, %s3, [#allocation4]
    $region25: #{tpu_custom_call.1} parent=1 // pred_fallthru
      _
    // Predicated region
    $region26: #{tpu_custom_call.1} parent=1 // pred_check
      _
    $region27: #{tpu_custom_call.1} parent=1 // pred_check_branch
      %156 = sbr.rel (0) target = $region29
    $region28: #{tpu_custom_call.1} parent=1 // pred_region
      %157 = dma.done [#allocation4], 32
    $region29: #{tpu_custom_call.1} parent=1 // pred_fallthru
      _
    %158 = vsyncpa [#allocation3], 1
    %159 = vsyncpa [#allocation6], 1
    %160 = vsyncpa [#allocation4], 1

</llo_original>
